<compile_context>
chip_gen: v6e
topology: v6e:2x2x1
jax: 0.10.0
libtpu: 0.0.40
codegen_flags: <defaults>
</compile_context>

<pallas_src>
import jax
import jax.numpy as jnp
from jax.experimental import pallas as pl
from jax.experimental.pallas import tpu as pltpu


def simple_nn_kernel(x_ref, w1_ref, b1_ref, w2_ref, b2_ref, out_ref):
    # Feature-major tile layout (batch on the 128-lane axis):
    #   x_ref:  (4,  TB)   w1_ref: (10, 4)   b1_ref: (10, 1)
    #   w2_ref: (3, 10)    b2_ref: (3, 1)    out_ref: (3, TB)
    x = x_ref[...]

    # fc1 / fc2 on the MXU: in this orientation the contraction dim is already
    # on sublanes and TB on lanes; this empties the VPU/XLU slots that the old
    # unrolled rank-1 formulation saturated (each fc2 term paid a cross-sublane
    # broadcast on the 2-unit XLU).
    h = jnp.dot(w1_ref[...], x, preferred_element_type=jnp.float32)   # (10, TB)
    h = jnp.maximum(h + b1_ref[...], 0.0)                             # bias + ReLU

    logits = jnp.dot(w2_ref[...], h, preferred_element_type=jnp.float32)  # (3, TB)
    logits = logits + b2_ref[...]

    # Max-stable softmax over the feature axis (sublanes), per batch column.
    m = jnp.max(logits, axis=0, keepdims=True)                         # (1, TB)
    e = jnp.exp(logits - m)                                            # EUP
    denom = jnp.sum(e, axis=0, keepdims=True)                          # (1, TB)
    # Exact divide so every row sums to 1 to f32 precision (approx reciprocal
    # previously failed the normalization check); cost is negligible here.
    out_ref[...] = (e / denom).astype(out_ref.dtype)


def _round_up(n, m):
    return ((n + m - 1) // m) * m


def simple_nn_forward(x, w1, b1, w2, b2, *, tb=65536):
    """x: (B, 4) f32.  Params in PyTorch convention:
       w1 (10, 4), b1 (10,), w2 (3, 10), b2 (3,).  Returns (B, 3) softmax probs."""
    B = x.shape[0]

    # Clamp the tile to the actual batch (multiple of the 128-lane width) so a
    # small batch isn't zero-padded out to a full 64K-column tile; large
    # batches get the full tile for per-grid-step overhead amortisation.
    tb = max(128, min(_round_up(tb, 128), _round_up(B, 128)))
    n_tiles = pl.cdiv(B, tb)
    Bp = n_tiles * tb

    # Wrapper-side layout plumbing to keep the PyTorch-style interface.
    # Documented cost: one extra HBM read+write of x and of the output each.
    # Prefer batch-last activations end-to-end to remove these passes.
    x_t = jnp.transpose(x)                                             # (4, B)
    if Bp != B:
        # Zero-pad the ragged final tile; padded columns produce finite
        # (meaningless) softmax values that are sliced away below.
        x_t = jnp.pad(x_t, ((0, 0), (0, Bp - B)))
    b1c = jnp.reshape(b1, (-1, 1))                                     # (10, 1)
    b2c = jnp.reshape(b2, (-1, 1))                                     # (3, 1)

    # Live VMEM is ~150 B per batch column (double-buffered x/out blocks plus
    # the (10,TB)/(3,TB) f32 intermediates).  Only raise the scoped-VMEM limit
    # when the smallest generation default (v5e: 16 MiB) would be exceeded,
    # and stay well under v7x's 64 MiB physical cap.
    live_vmem_bytes = 160 * tb
    extra_params = {}
    if live_vmem_bytes > (14 << 20):
        extra_params["vmem_limit_bytes"] = min(int(live_vmem_bytes * 3 // 2), 48 << 20)

    cost = pl.CostEstimate(
        flops=2 * Bp * (4 * 10 + 10 * 3),
        transcendentals=3 * Bp,
        bytes_accessed=(4 + 3) * 4 * Bp,                               # ~28 B / row
    )

    out_t = pl.pallas_call(
        simple_nn_kernel,
        out_shape=jax.ShapeDtypeStruct((3, Bp), jnp.float32),
        grid=(n_tiles,),
        in_specs=[
            pl.BlockSpec((4, tb), lambda i: (0, i)),     # batch-tiled activations
            pl.BlockSpec((10, 4), lambda i: (0, 0)),     # weights resident in VMEM
            pl.BlockSpec((10, 1), lambda i: (0, 0)),
            pl.BlockSpec((3, 10), lambda i: (0, 0)),
            pl.BlockSpec((3, 1), lambda i: (0, 0)),
        ],
        out_specs=pl.BlockSpec((3, tb), lambda i: (0, i)),  # lane-dense output store
        compiler_params=pltpu.CompilerParams(
            dimension_semantics=("parallel",),           # megacore sharding on v7x
            **extra_params,
        ),
        cost_estimate=cost,
    )(x_t, w1, b1c, w2, b2c)

    return jnp.transpose(out_t)[:B]                                    # (B, 3)


def init_params(key):
    # Deterministic init mimicking nn.Linear's uniform(-1/sqrt(fan_in), +...),
    # in PyTorch's (out_features, in_features) convention.
    k1, k2, k3, k4 = jax.random.split(key, 4)
    bound1 = 1.0 / jnp.sqrt(4.0)
    bound2 = 1.0 / jnp.sqrt(10.0)
    w1 = jax.random.uniform(k1, (10, 4), jnp.float32, -bound1, bound1)
    b1 = jax.random.uniform(k2, (10,), jnp.float32, -bound1, bound1)
    w2 = jax.random.uniform(k3, (3, 10), jnp.float32, -bound2, bound2)
    b2 = jax.random.uniform(k4, (3,), jnp.float32, -bound2, bound2)
    return w1, b1, w2, b2


if __name__ == "__main__":
    key = jax.random.PRNGKey(0)
    k_x, k_p = jax.random.split(key)

    batch = 8
    x = jax.random.normal(k_x, (batch, 4), jnp.float32)
    w1, b1, w2, b2 = init_params(k_p)

    out = simple_nn_forward(x, w1, b1, w2, b2)
    out = jax.block_until_ready(out)

    # Pure-JAX reference (PyTorch semantics: y = x @ W.T + b).
    ref_h = jnp.maximum(x @ w1.T + b1, 0.0)
    ref = jax.nn.softmax(ref_h @ w2.T + b2, axis=1)

    assert out.shape == (batch, 3)
    assert jnp.allclose(out, ref, atol=1e-5), "mismatch vs JAX reference"
    assert jnp.allclose(jnp.sum(out, axis=1), 1.0, atol=1e-5), "rows not normalized"

    print("KERNEL_OK")
</pallas_src>

<mosaic_0001>
module attributes {stable_mosaic.version = 11 : i64} {
  func.func @simple_nn_kernel(%arg0: i32, %arg1: memref<4x128xf32, #tpu.memory_space<vmem>>, %arg2: memref<10x4xf32, #tpu.memory_space<vmem>>, %arg3: memref<10x1xf32, #tpu.memory_space<vmem>>, %arg4: memref<3x10xf32, #tpu.memory_space<vmem>>, %arg5: memref<3x1xf32, #tpu.memory_space<vmem>>, %arg6: memref<3x128xf32, #tpu.memory_space<vmem>>) attributes {dimension_semantics = [#tpu.dimension_semantics<parallel>], iteration_bounds = array<i64: 1>, scalar_prefetch = 0 : i64, scratch_operands = 0 : i64, tpu.core_type = #tpu.core_type<tc>, window_params = [{transform_indices = @transform_0, window_bounds = array<i64: 4, 128>}, {pipeline_mode = #tpu.pipeline_mode<synchronous>, transform_indices = @transform_1, window_bounds = array<i64: 10, 4>}, {pipeline_mode = #tpu.pipeline_mode<synchronous>, transform_indices = @transform_2, window_bounds = array<i64: 10, 1>}, {pipeline_mode = #tpu.pipeline_mode<synchronous>, transform_indices = @transform_3, window_bounds = array<i64: 3, 10>}, {pipeline_mode = #tpu.pipeline_mode<synchronous>, transform_indices = @transform_4, window_bounds = array<i64: 3, 1>}, {transform_indices = @transform_5, window_bounds = array<i64: 3, 128>}]} {
    %c0 = arith.constant 0 : index
    %c0_0 = arith.constant 0 : index
    %0 = vector.load %arg1[%c0, %c0_0] : memref<4x128xf32, #tpu.memory_space<vmem>>, vector<4x128xf32>
    %c0_1 = arith.constant 0 : index
    %c0_2 = arith.constant 0 : index
    %1 = vector.load %arg2[%c0_1, %c0_2] : memref<10x4xf32, #tpu.memory_space<vmem>>, vector<10x4xf32>
    %cst = arith.constant dense<0.000000e+00> : vector<10x128xf32>
    %2 = tpu.matmul %1, %0, %cst {dimension_numbers = #tpu.dot_dimension_numbers<[1], [0], [0], [1], [0, 0, 1, 1], [], []>} : vector<10x4xf32>, vector<4x128xf32>, vector<10x128xf32> -> vector<10x128xf32>
    %c0_3 = arith.constant 0 : index
    %c0_4 = arith.constant 0 : index
    %3 = vector.load %arg3[%c0_3, %c0_4] : memref<10x1xf32, #tpu.memory_space<vmem>>, vector<10x1xf32>
    %4 = vector.broadcast %3 : vector<10x1xf32> to vector<10x128xf32>
    %5 = arith.addf %2, %4 : vector<10x128xf32>
    %cst_5 = arith.constant 0.000000e+00 : f32
    %6 = vector.broadcast %cst_5 : f32 to vector<10x128xf32>
    %7 = arith.maximumf %5, %6 : vector<10x128xf32>
    %c0_6 = arith.constant 0 : index
    %c0_7 = arith.constant 0 : index
    %8 = vector.load %arg4[%c0_6, %c0_7] : memref<3x10xf32, #tpu.memory_space<vmem>>, vector<3x10xf32>
    %cst_8 = arith.constant dense<0.000000e+00> : vector<3x128xf32>
    %9 = tpu.matmul %8, %7, %cst_8 {dimension_numbers = #tpu.dot_dimension_numbers<[1], [0], [0], [1], [0, 0, 1, 1], [], []>} : vector<3x10xf32>, vector<10x128xf32>, vector<3x128xf32> -> vector<3x128xf32>
    %c0_9 = arith.constant 0 : index
    %c0_10 = arith.constant 0 : index
    %10 = vector.load %arg5[%c0_9, %c0_10] : memref<3x1xf32, #tpu.memory_space<vmem>>, vector<3x1xf32>
    %11 = vector.broadcast %10 : vector<3x1xf32> to vector<3x128xf32>
    %12 = arith.addf %9, %11 : vector<3x128xf32>
    %cst_11 = arith.constant dense<0xFF800000> : vector<128xf32>
    %13 = vector.multi_reduction <maximumf>, %12, %cst_11 [0] : vector<3x128xf32> to vector<128xf32>
    %14 = vector.shape_cast %13 : vector<128xf32> to vector<1x128xf32>
    %15 = vector.broadcast %14 : vector<1x128xf32> to vector<3x128xf32>
    %16 = arith.subf %12, %15 : vector<3x128xf32>
    %17 = math.exp %16 : vector<3x128xf32>
    %cst_12 = arith.constant dense<0.000000e+00> : vector<128xf32>
    %18 = vector.multi_reduction <add>, %17, %cst_12 [0] : vector<3x128xf32> to vector<128xf32>
    %19 = vector.shape_cast %18 : vector<128xf32> to vector<1x128xf32>
    %20 = vector.broadcast %19 : vector<1x128xf32> to vector<3x128xf32>
    %21 = arith.divf %17, %20 : vector<3x128xf32>
    %c0_13 = arith.constant 0 : index
    %c0_14 = arith.constant 0 : index
    %22 = vector.load %arg6[%c0_13, %c0_14] : memref<3x128xf32, #tpu.memory_space<vmem>>, vector<3x128xf32>
    tpu.vector_store %arg6[%c0_13, %c0_14], %21 {strides = array<i32>} : memref<3x128xf32, #tpu.memory_space<vmem>>, vector<3x128xf32>,
    return
  }
  func.func @transform_0(%arg0: i32) -> (i32, i32) {
    %c0_i32 = arith.constant 0 : i32
    %c0_i32_0 = arith.constant 0 : i32
    return %c0_i32, %arg0 : i32, i32
  }
  func.func @transform_1(%arg0: i32) -> (i32, i32) {
    %c0_i32 = arith.constant 0 : i32
    %c0_i32_0 = arith.constant 0 : i32
    %c0_i32_1 = arith.constant 0 : i32
    return %c0_i32, %c0_i32_0 : i32, i32
  }
  func.func @transform_2(%arg0: i32) -> (i32, i32) {
    %c0_i32 = arith.constant 0 : i32
    %c0_i32_0 = arith.constant 0 : i32
    %c0_i32_1 = arith.constant 0 : i32
    return %c0_i32, %c0_i32_0 : i32, i32
  }
  func.func @transform_3(%arg0: i32) -> (i32, i32) {
    %c0_i32 = arith.constant 0 : i32
    %c0_i32_0 = arith.constant 0 : i32
    %c0_i32_1 = arith.constant 0 : i32
    return %c0_i32, %c0_i32_0 : i32, i32
  }
  func.func @transform_4(%arg0: i32) -> (i32, i32) {
    %c0_i32 = arith.constant 0 : i32
    %c0_i32_0 = arith.constant 0 : i32
    %c0_i32_1 = arith.constant 0 : i32
    return %c0_i32, %c0_i32_0 : i32, i32
  }
  func.func @transform_5(%arg0: i32) -> (i32, i32) {
    %c0_i32 = arith.constant 0 : i32
    %c0_i32_0 = arith.constant 0 : i32
    return %c0_i32, %arg0 : i32, i32
  }
}

</mosaic_0001>

<llo_original>
// kernel: tpu_custom_call.1
$region0: #{tpu_custom_call.1}
  #allocation0 [shape = 'u32[]', space=smem, size = 0x4, offset = 0x4, fixed_abs, tag = 'smem constant byte address 0x4 - core index']
  #allocation1 [shape = 'u32[144,128]{1,0:T(1,128)}', space=vmem, size = 0x12000, scoped, tag = 'internal scratch']
  %s0 = inlined_call_operand.vmem [shape: f32[4,128], index: 0, kind: input, shape index: {}]
  %s1 = inlined_call_operand.vmem [shape: f32[10,4], index: 1, kind: input, shape index: {}]
  %s2 = inlined_call_operand.vmem [shape: f32[10,1], index: 2, kind: input, shape index: {}]
  %s3 = inlined_call_operand.vmem [shape: f32[3,10], index: 3, kind: input, shape index: {}]
  %s4 = inlined_call_operand.vmem [shape: f32[3,1], index: 4, kind: input, shape index: {}]
  %s5 = inlined_call_operand.hbm [shape: f32[3,128], index: 5, kind: output, shape index: {}]
  %s6 = sld [smem:[#allocation0]]
  $region30: #{tpu_custom_call.1} parent=0
    _
  %s8 = ssub.s32 1, %s6
  %s9 = scalar_select 0, %s8, %s6
  $region1: #{tpu_custom_call.1} parent=0
    #allocation2 [shape = 'u8[2048]{0}', space=vmem, size = 0x800, scoped, tag = 'output window, operand 0, single buffered']
    #allocation3 [shape = 's32[1]{0}', space=sflag, size = 0x4, scoped, tag = 'scoped memory for tpu_custom_call.1']
    %10 = vsyncpa [#allocation3], 0
    // Predicated region
    $region2: #{tpu_custom_call.1} parent=1 // pred_check
      _
    $region3: #{tpu_custom_call.1} parent=1 // pred_check_branch
      %12 = sbr.rel (0) target = $region5
    $region4: #{tpu_custom_call.1} parent=1 // pred_region
      _
    $region5: #{tpu_custom_call.1} parent=1 // pred_fallthru
      _
    // Predicated region
    $region6: #{tpu_custom_call.1} parent=1 // pred_check
      _
    $region7: #{tpu_custom_call.1} parent=1 // pred_check_branch
      %14 = sbr.rel (0) target = $region9
    $region8: #{tpu_custom_call.1} parent=1 // pred_region
      _
    $region9: #{tpu_custom_call.1} parent=1 // pred_fallthru
      _
    // Predicated region
    $region10: #{tpu_custom_call.1} parent=1 // pred_check
      _
    $region11: #{tpu_custom_call.1} parent=1 // pred_check_branch
      %16 = sbr.rel (0) target = $region13
    $region12: #{tpu_custom_call.1} parent=1 // pred_region
      _
    $region13: #{tpu_custom_call.1} parent=1 // pred_fallthru
      _
    // Predicated region
    $region14: #{tpu_custom_call.1} parent=1 // pred_check
      _
    $region15: #{tpu_custom_call.1} parent=1 // pred_check_branch
      %18 = sbr.rel (0) target = $region17
    $region16: #{tpu_custom_call.1} parent=1 // pred_region
      _
    $region17: #{tpu_custom_call.1} parent=1 // pred_fallthru
      _
    // Predicated region
    $region18: #{tpu_custom_call.1} parent=1 // pred_check
      _
    $region19: #{tpu_custom_call.1} parent=1 // pred_check_branch
      %20 = sbr.rel (0) target = $region21
    $region20: #{tpu_custom_call.1} parent=1 // pred_region
      _
    $region21: #{tpu_custom_call.1} parent=1 // pred_fallthru
      _
    %v21 = vld [vmem:[%s0] sm:$0xf]
    %v22 = vld [vmem:[%s1] sm:$0xff]
    %v23 = vld [vmem:[%s1 + $0x8] sm:$0x3]
    %v24 = vld [vmem:[%s2] sm:$0xff]
    %v25 = vld [vmem:[%s2 + $0x8] sm:$0x3]
    %27 = vset.pattern.permute.xlu0 0
    %28 = vperm.xlu0 %27, %v24
    %v29 = vpop.permute.xlu0 %28
    %32 = vset.pattern.permute.xlu0 0
    %33 = vperm.xlu0 %32, %v25
    %v34 = vpop.permute.xlu0 %33
    %vm36 = vcmask 31744
    %v38 = vsel %vm36, %v22, 0
    %v41 = vsel %vm36, %v23, 0
    %vm43 = vcmask 1043456
    %v45 = vsel %vm43, %v21, 0
    %47 = vmatprep.subr.mxu0 0.0
    %48 = vmatpush1.msra.mxu0 0.0
    %49 = vmatprep.subr.mxu0 0.0
    %50 = vmatpush1.msra.mxu0 0.0
    %51 = vmatprep.subr.mxu0 0.0
    %52 = vmatpush1.msra.mxu0 0.0
    %53 = vmatprep.subr.mxu0 0.0
    %54 = vmatpush1.msra.mxu0 0.0
    %55 = vmatprep.subr.mxu0 0.0
    %56 = vmatpush1.msra.mxu0 0.0
    %57 = vmatprep.subr.mxu0 0.0
    %58 = vmatpush1.msra.mxu0 0.0
    %59 = vmatprep.subr.mxu0 0.0
    %60 = vmatpush1.msra.mxu0 0.0
    %61 = vmatprep.subr.mxu0 0.0
    %62 = vmatpush1.msra.mxu0 0.0
    %63 = vmatprep.subr.mxu0 0.0
    %64 = vmatpush1.msra.mxu0 0.0
    %65 = vmatprep.subr.mxu0 0.0
    %66 = vmatpush1.msra.mxu0 0.0
    %67 = vmatprep.subr.mxu0 0.0
    %68 = vmatpush1.msra.mxu0 0.0
    %69 = vmatprep.subr.mxu0 0.0
    %70 = vmatpush1.msra.mxu0 0.0
    %71 = vmatprep.subr.mxu0 0.0
    %72 = vmatpush1.msra.mxu0 0.0
    %73 = vmatprep.subr.mxu0 0.0
    %74 = vmatpush1.msra.mxu0 0.0
    %75 = vmatprep.subr.mxu0 0.0
    %76 = vmatpush1.msra.mxu0 0.0
    %77 = vmatprep.subr.mxu0 0.0
    %78 = vmatpush1.msra.mxu0 %v45
    %79 = vmatprep.subr.mxu0 0.0
    %80 = vmatpush2.msra.mxu0 0.0
    %81 = vmatprep.subr.mxu0 0.0
    %82 = vmatpush2.msra.mxu0 0.0
    %83 = vmatprep.subr.mxu0 0.0
    %84 = vmatpush2.msra.mxu0 0.0
    %85 = vmatprep.subr.mxu0 0.0
    %86 = vmatpush2.msra.mxu0 0.0
    %87 = vmatprep.subr.mxu0 0.0
    %88 = vmatpush2.msra.mxu0 0.0
    %89 = vmatprep.subr.mxu0 0.0
    %90 = vmatpush2.msra.mxu0 0.0
    %91 = vmatprep.subr.mxu0 0.0
    %92 = vmatpush2.msra.mxu0 0.0
    %93 = vmatprep.subr.mxu0 0.0
    %94 = vmatpush2.msra.mxu0 0.0
    %95 = vmatprep.subr.mxu0 0.0
    %96 = vmatpush2.msra.mxu0 0.0
    %97 = vmatprep.subr.mxu0 0.0
    %98 = vmatpush2.msra.mxu0 0.0
    %99 = vmatprep.subr.mxu0 0.0
    %100 = vmatpush2.msra.mxu0 0.0
    %101 = vmatprep.subr.mxu0 0.0
    %102 = vmatpush2.msra.mxu0 0.0
    %103 = vmatprep.subr.mxu0 0.0
    %104 = vmatpush2.msra.mxu0 0.0
    %105 = vmatprep.subr.mxu0 0.0
    %106 = vmatpush2.msra.mxu0 0.0
    %107 = vmatprep.subr.mxu0 0.0
    %108 = vmatpush2.msra.mxu0 0.0
    %109 = vmatprep.subr.mxu0 0.0
    %110 = vmatpush2.msra.mxu0 0.0
    %111 = vmatprep.mubr.f32.mxu0 0.0
    %112 = vmatmul.mubr.f32.gmra.mxu0 %v38
    %v113 = vpop.f32.mrf.mxu0
    %v114 = vadd.f32 %v29, %v113
    %v115 = vpop.f32.mrf.mxu0
    %116 = vmatprep.mubr.f32.mxu0 0.0
    %117 = vmatmul.mubr.f32.gmra.mxu0 %v41
    %v118 = vpop.f32.mrf.mxu0
    %v119 = vadd.f32 %v34, %v118
    %v120 = vpop.f32.mrf.mxu0
    %121 = vdwg.mxu0
    %v122 = vmax.f32 %v114, 0.0
    %v123 = vmax.f32 %v119, 0.0
    %v124 = vld [vmem:[%s3] sm:$0x7]
    %v125 = vld [vmem:[%s4] sm:$0x7]
    %127 = vset.pattern.permute.xlu0 0
    %128 = vperm.xlu0 %127, %v125
    %v129 = vpop.permute.xlu0 %128
    %vm131 = vcmask 80896
    %v133 = vsel %vm131, %v124, 0
    %vm135 = vcmask 1041408
    %v137 = vsel %vm135, %v123, 0
    %139 = vmatprep.subr.mxu0 0.0
    %140 = vmatpush1.msra.mxu0 0.0
    %141 = vmatprep.subr.mxu0 0.0
    %142 = vmatpush1.msra.mxu0 0.0
    %143 = vmatprep.subr.mxu0 0.0
    %144 = vmatpush1.msra.mxu0 0.0
    %145 = vmatprep.subr.mxu0 0.0
    %146 = vmatpush1.msra.mxu0 0.0
    %147 = vmatprep.subr.mxu0 0.0
    %148 = vmatpush1.msra.mxu0 0.0
    %149 = vmatprep.subr.mxu0 0.0
    %150 = vmatpush1.msra.mxu0 0.0
    %151 = vmatprep.subr.mxu0 0.0
    %152 = vmatpush1.msra.mxu0 0.0
    %153 = vmatprep.subr.mxu0 0.0
    %154 = vmatpush1.msra.mxu0 0.0
    %155 = vmatprep.subr.mxu0 0.0
    %156 = vmatpush1.msra.mxu0 0.0
    %157 = vmatprep.subr.mxu0 0.0
    %158 = vmatpush1.msra.mxu0 0.0
    %159 = vmatprep.subr.mxu0 0.0
    %160 = vmatpush1.msra.mxu0 0.0
    %161 = vmatprep.subr.mxu0 0.0
    %162 = vmatpush1.msra.mxu0 0.0
    %163 = vmatprep.subr.mxu0 0.0
    %164 = vmatpush1.msra.mxu0 0.0
    %165 = vmatprep.subr.mxu0 0.0
    %166 = vmatpush1.msra.mxu0 0.0
    %167 = vmatprep.subr.mxu0 0.0
    %168 = vmatpush1.msra.mxu0 %v137
    %169 = vmatprep.subr.mxu0 0.0
    %170 = vmatpush1.msra.mxu0 %v122
    %171 = vmatprep.subr.mxu0 0.0
    %172 = vmatpush2.msra.mxu0 0.0
    %173 = vmatprep.subr.mxu0 0.0
    %174 = vmatpush2.msra.mxu0 0.0
    %175 = vmatprep.subr.mxu0 0.0
    %176 = vmatpush2.msra.mxu0 0.0
    %177 = vmatprep.subr.mxu0 0.0
    %178 = vmatpush2.msra.mxu0 0.0
    %179 = vmatprep.subr.mxu0 0.0
    %180 = vmatpush2.msra.mxu0 0.0
    %181 = vmatprep.subr.mxu0 0.0
    %182 = vmatpush2.msra.mxu0 0.0
    %183 = vmatprep.subr.mxu0 0.0
    %184 = vmatpush2.msra.mxu0 0.0
    %185 = vmatprep.subr.mxu0 0.0
    %186 = vmatpush2.msra.mxu0 0.0
    %187 = vmatprep.subr.mxu0 0.0
    %188 = vmatpush2.msra.mxu0 0.0
    %189 = vmatprep.subr.mxu0 0.0
    %190 = vmatpush2.msra.mxu0 0.0
    %191 = vmatprep.subr.mxu0 0.0
    %192 = vmatpush2.msra.mxu0 0.0
    %193 = vmatprep.subr.mxu0 0.0
    %194 = vmatpush2.msra.mxu0 0.0
    %195 = vmatprep.subr.mxu0 0.0
    %196 = vmatpush2.msra.mxu0 0.0
    %197 = vmatprep.subr.mxu0 0.0
    %198 = vmatpush2.msra.mxu0 0.0
    %199 = vmatprep.subr.mxu0 0.0
    %200 = vmatpush2.msra.mxu0 0.0
    %201 = vmatprep.subr.mxu0 0.0
    %202 = vmatpush2.msra.mxu0 0.0
    %203 = vmatprep.mubr.f32.mxu0 0.0
    %204 = vmatmul.mubr.f32.gmra.mxu0 %v133
    %v205 = vpop.f32.mrf.mxu0
    %v206 = vadd.f32 %v129, %v205
    %v207 = vpop.f32.mrf.mxu0
    %208 = vdwg.mxu0
    %vm209 = vcmask 1042432
    %v210 = vsel %vm209, %v206, -inf
    %v211 = vrot.slane %v210, 4
    %v212 = vmax.f32 %v210, %v211
    %v213 = vrot.slane %v212, 2
    %v214 = vmax.f32 %v212, %v213
    %v215 = vrot.slane %v214, 1
    %v216 = vmax.f32 %v214, %v215
    %v217 = vsub.f32 %v206, %v216
    %v218 = vmul.f32 %v217, 1.442695
    %v219 = vpow.pop %v218
    %v220 = vsel %vm209, %v219, 0.0
    %v221 = vrot.slane %v220, 4
    %v222 = vadd.f32 %v220, %v221
    %v223 = vrot.slane %v222, 2
    %v224 = vadd.f32 %v222, %v223
    %v225 = vrot.slane %v224, 1
    %v226 = vadd.f32 %v224, %v225
    %v227 = vrcp.pop %v226
    %v228 = vmul.f32 %v219, %v227
    %229 = vst [vmem:[#allocation2] sm:$0x7] %v228
    // Predicated region
    $region22: #{tpu_custom_call.1} parent=1 // pred_check
      _
    $region23: #{tpu_custom_call.1} parent=1 // pred_check_branch
      %231 = sbr.rel (0) target = $region25
    $region24: #{tpu_custom_call.1} parent=1 // pred_region
      %s233 = ssub.s32 64, 64
      %234 = vsyncadd [#allocation3], %s233
      %s236 = sshll.u32 [#allocation2], 4
      %s237 = int_to_ptr.vmem [resolvable:$true] %s236
      %239 = dma.vmem_to_hbm [thread:$0]  %s237, 64, %s5, [#allocation3]
    $region25: #{tpu_custom_call.1} parent=1 // pred_fallthru
      _
    // Predicated region
    $region26: #{tpu_custom_call.1} parent=1 // pred_check
      _
    $region27: #{tpu_custom_call.1} parent=1 // pred_check_branch
      %241 = sbr.rel (0) target = $region29
    $region28: #{tpu_custom_call.1} parent=1 // pred_region
      %242 = dma.done [#allocation3], 64
    $region29: #{tpu_custom_call.1} parent=1 // pred_fallthru
      _
    %243 = vsyncpa [#allocation3], 1

</llo_original>
